<compile_context>
chip_gen: v7x
topology: tpu7x:2x2x1
jax: 0.10.0
libtpu: 0.0.40
codegen_flags: <defaults>
</compile_context>

<pallas_src>
import functools
import math

import numpy as np
import jax
import jax.numpy as jnp
from jax.experimental import pallas as pl
from jax.experimental.pallas import tpu as pltpu


def _round_up(x, m):
    return ((x + m - 1) // m) * m


def _vmem_limit_bytes():
    """Generation-aware scoped-VMEM request: ~3/4 of physical per-TC VMEM
    (~48 MiB on v7x's 64 MiB, ~96 MiB on v5e/v6e's 128 MiB)."""
    try:
        cap = int(pltpu.get_tpu_info().vmem_capacity_bytes)
    except Exception:
        cap = 64 * 1024 * 1024          # safe fallback on every generation
    return max(32 * 1024 * 1024, (cap * 3) // 4)


# ----------------------------------------------------------------------------
# Kernels
# ----------------------------------------------------------------------------

def _finalize(acc_ref, dinv_ref, w_ref, b_ref, o_ref, apply_relu):
    """GCN normalization by 1/(in_deg+1), dense projection + bias, relu."""
    agg = acc_ref[...] * dinv_ref[...]
    out = jnp.dot(agg.astype(w_ref.dtype), w_ref[...],
                  preferred_element_type=jnp.float32)
    out = out + b_ref[...]
    if apply_relu:
        out = jnp.maximum(out, 0.0)
    o_ref[...] = out.astype(o_ref.dtype)


def _sage_layer_dense_kernel(a_ref, h_ref, w_ref, b_ref, dinv_ref, o_ref,
                             acc_ref, *, apply_relu):
    """One grid step of relu?(((A_hat @ H) * deg_inv) @ W + b), K-tiled."""
    k = pl.program_id(1)

    @pl.when(k == 0)
    def _():
        acc_ref[...] = jnp.zeros_like(acc_ref)

    # int8 -> bf16 widen is exact for {0,1,2}; small VPU op hidden under MXU/DMA.
    a = a_ref[...].astype(jnp.bfloat16)
    acc_ref[...] += jnp.dot(a, h_ref[...], preferred_element_type=jnp.float32)

    @pl.when(k == pl.num_programs(1) - 1)
    def _():
        _finalize(acc_ref, dinv_ref, w_ref, b_ref, o_ref, apply_relu)


def _sage_layer_bsr_kernel(ktiles_ref, kcount_ref, a_ref, h_ref, w_ref, b_ref,
                           dinv_ref, o_ref, acc_ref, *, apply_relu):
    """Block-sparse variant: the K axis walks only non-empty (tm, tk) blocks."""
    i = pl.program_id(0)
    k = pl.program_id(1)

    @pl.when(k == 0)
    def _():
        acc_ref[...] = jnp.zeros_like(acc_ref)

    @pl.when(k < kcount_ref[i])          # ragged per-row-tile block counts
    def _():
        a = a_ref[...].astype(jnp.bfloat16)
        acc_ref[...] += jnp.dot(a, h_ref[...],
                                preferred_element_type=jnp.float32)

    @pl.when(k == pl.num_programs(1) - 1)
    def _():
        _finalize(acc_ref, dinv_ref, w_ref, b_ref, o_ref, apply_relu)


# ----------------------------------------------------------------------------
# Wrappers
# ----------------------------------------------------------------------------

def prepare_graph(a, *, tm=512, tk=1024):
    """One-time, per-graph preprocessing (hoisted out of the forward path):

      * pick tiles (multiples of 128) and zero-pad N up to a common multiple
      * A_hat = A + I stored as int8 (entries 0/1/2 -> exact)
      * deg_inv = 1/(in_deg + 1) = 1/rowsum(A_hat), pad rows get 1.0
      * per-row-tile tables of non-empty k-tiles for the block-sparse path
    """
    a_np = np.asarray(jax.device_get(a), dtype=np.float32)
    N = a_np.shape[0]

    # Tile / padding selection. tm, tk are multiples of 128; N_pad is a common
    # multiple of both (so no asserts / masked last tiles are needed).
    # Note (v7x): prefer tm such that N_pad // tm is even so the 'parallel'
    # row axis balances across the two TensorCores.
    n_pad = _round_up(N, 128)
    tm = min(tm, n_pad)
    tk = min(tk, n_pad)
    lcm = tm * tk // math.gcd(tm, tk)
    n_pad = _round_up(n_pad, lcm)

    a_hat = np.zeros((n_pad, n_pad), np.float32)
    a_hat[:N, :N] = a_np
    a_hat[np.arange(N), np.arange(N)] += 1.0       # fold self term: A_hat = A + I

    deg = a_hat.sum(axis=1, keepdims=True)
    deg_inv = np.where(deg > 0.0, 1.0 / np.maximum(deg, 1.0), 1.0)
    deg_inv = deg_inv.astype(np.float32)

    a_i8 = a_hat.astype(np.int8)                   # 1 byte/elem in HBM

    # Block occupancy for the block-sparse path.
    n_rt, n_kt = n_pad // tm, n_pad // tk
    occ = a_hat.reshape(n_rt, tm, n_kt, tk).any(axis=(1, 3))   # (n_rt, n_kt)
    kcount = occ.sum(axis=1).astype(np.int32)
    max_k = max(int(kcount.max()) if kcount.size else 0, 1)
    ktiles = np.zeros((n_rt, max_k), np.int32)
    for i in range(n_rt):
        ids = np.nonzero(occ[i])[0].astype(np.int32)
        if ids.size == 0:
            ids = np.zeros((1,), np.int32)
        cnt = min(ids.size, max_k)
        ktiles[i, :cnt] = ids[:cnt]
        ktiles[i, cnt:] = ids[cnt - 1]             # repeat last -> buffer reuse

    return dict(
        n=N, n_pad=n_pad, tm=tm, tk=tk,
        a=jnp.asarray(a_i8),
        deg_inv=jnp.asarray(deg_inv),
        ktiles=jnp.asarray(ktiles),
        kcount=jnp.asarray(kcount),
    )


def sage_layer(graph, h, w, b, *, apply_relu, out_dtype, block_sparse):
    """One fused SAGEConv('gcn') layer: relu?(((A_hat@H) * deg_inv) @ W + b)."""
    a, dinv = graph["a"], graph["deg_inv"]
    tm, tk, n_pad = graph["tm"], graph["tk"], graph["n_pad"]
    f_in = h.shape[1]
    f_out = w.shape[1]

    compiler_params = pltpu.CompilerParams(
        dimension_semantics=("parallel", "arbitrary"),
        vmem_limit_bytes=_vmem_limit_bytes(),
    )

    if not block_sparse:
        grid_spec = pltpu.PrefetchScalarGridSpec(
            num_scalar_prefetch=0,
            grid=(n_pad // tm, n_pad // tk),                       # rows, K
            in_specs=[
                pl.BlockSpec((tm, tk), lambda i, k: (i, k)),       # A_hat tile
                pl.BlockSpec((tk, f_in), lambda i, k: (k, 0)),     # H k-slab
                pl.BlockSpec((f_in, f_out), lambda i, k: (0, 0)),  # W (padded)
                pl.BlockSpec((1, f_out), lambda i, k: (0, 0)),     # bias
                pl.BlockSpec((tm, 1), lambda i, k: (i, 0)),        # 1/(deg+1)
            ],
            out_specs=pl.BlockSpec((tm, f_out), lambda i, k: (i, 0)),
            scratch_shapes=[pltpu.VMEM((tm, f_in), jnp.float32)],  # accumulator
        )
        kernel = functools.partial(_sage_layer_dense_kernel,
                                   apply_relu=apply_relu)
        args = (a, h, w, b, dinv)
    else:
        ktiles, kcount = graph["ktiles"], graph["kcount"]
        max_k = ktiles.shape[1]
        grid_spec = pltpu.PrefetchScalarGridSpec(
            num_scalar_prefetch=2,                                 # ktiles, kcount
            grid=(n_pad // tm, max_k),
            in_specs=[
                pl.BlockSpec((tm, tk), lambda i, k, kt, kc: (i, kt[i, k])),
                pl.BlockSpec((tk, f_in), lambda i, k, kt, kc: (kt[i, k], 0)),
                pl.BlockSpec((f_in, f_out), lambda i, k, kt, kc: (0, 0)),
                pl.BlockSpec((1, f_out), lambda i, k, kt, kc: (0, 0)),
                pl.BlockSpec((tm, 1), lambda i, k, kt, kc: (i, 0)),
            ],
            out_specs=pl.BlockSpec((tm, f_out), lambda i, k, kt, kc: (i, 0)),
            scratch_shapes=[pltpu.VMEM((tm, f_in), jnp.float32)],
        )
        kernel = functools.partial(_sage_layer_bsr_kernel,
                                   apply_relu=apply_relu)
        args = (ktiles, kcount, a, h, w, b, dinv)

    return pl.pallas_call(
        kernel,
        out_shape=jax.ShapeDtypeStruct((n_pad, f_out), out_dtype),
        grid_spec=grid_spec,
        compiler_params=compiler_params,
    )(*args)


def init_sage_params(key, in_feats, n_hidden, n_classes, n_layers):
    """Deterministic (Glorot-like) init of fc_neigh weights/biases per layer."""
    if n_layers > 1:
        dims = [in_feats] + [n_hidden] * (n_layers - 1) + [n_classes]
    else:
        dims = [in_feats, n_classes]
    params = []
    for l in range(len(dims) - 1):
        f_in, f_out = dims[l], dims[l + 1]
        key, wk = jax.random.split(key)
        scale = jnp.sqrt(2.0 / (f_in + f_out)).astype(jnp.float32)
        w = jax.random.normal(wk, (f_in, f_out), dtype=jnp.float32) * scale
        b = jnp.zeros((1, f_out), dtype=jnp.float32)
        params.append((w, b))
    return params


def sage_forward(graph, x, params, *, block_sparse=False):
    """Full-graph SAGE forward (eval mode: dropout == identity)."""
    # TODO(synk): nn.Dropout in training mode (random masking) not implemented;
    # eval-mode dropout is the identity, which is what is reproduced here.
    N, n_pad = graph["n"], graph["n_pad"]
    h = jnp.zeros((n_pad, x.shape[1]), jnp.bfloat16)
    h = h.at[:N].set(x.astype(jnp.bfloat16))

    n_layers = len(params)
    f_in_pad = x.shape[1]            # keep first-layer F_in unpadded (HBM-bound)
    n_classes = params[-1][0].shape[1]
    for l, (w, b) in enumerate(params):
        f_in, f_out = w.shape
        f_out_pad = _round_up(f_out, 128)        # lane-dense output width
        w_p = jnp.zeros((f_in_pad, f_out_pad), jnp.bfloat16)
        w_p = w_p.at[:f_in, :f_out].set(w.astype(jnp.bfloat16))
        b_p = jnp.zeros((1, f_out_pad), jnp.float32).at[:, :f_out].set(b)
        last = (l == n_layers - 1)
        h = sage_layer(graph, h, w_p, b_p,
                       apply_relu=not last,
                       out_dtype=jnp.float32 if last else jnp.bfloat16,
                       block_sparse=block_sparse)
        f_in_pad = f_out_pad
    return h[:N, :n_classes]                     # strip row + lane padding


def sage_reference(a, x, params):
    """Pure-JAX reference with the same bf16 casts (for tight comparison)."""
    N = a.shape[0]
    a_hat = a + jnp.eye(N, dtype=a.dtype)
    deg_inv = 1.0 / jnp.sum(a_hat, axis=1, keepdims=True)
    a_bf = a_hat.astype(jnp.bfloat16)
    h = x.astype(jnp.bfloat16)
    n_layers = len(params)
    for l, (w, b) in enumerate(params):
        agg = jnp.dot(a_bf, h, preferred_element_type=jnp.float32) * deg_inv
        out = jnp.dot(agg.astype(jnp.bfloat16), w.astype(jnp.bfloat16),
                      preferred_element_type=jnp.float32) + b
        if l != n_layers - 1:
            h = jnp.maximum(out, 0.0).astype(jnp.bfloat16)
        else:
            h = out
    return h


if __name__ == "__main__":
    key = jax.random.PRNGKey(0)

    # Small synthetic graph: N nodes, dense adjacency, plus features.
    N = 256          # number of nodes
    in_feats = 32
    n_hidden = 64
    n_classes = 16
    n_layers = 2     # SAGEConv(32->64) -> relu -> SAGEConv(64->16)

    k_a, k_x, k_p = jax.random.split(key, 3)
    # Deterministic sparse-ish adjacency (~5% density), stored dense; zero one
    # quadrant so the block-sparse path has genuinely empty blocks to skip.
    a = (jax.random.uniform(k_a, (N, N)) < 0.05).astype(jnp.float32)
    a = a.at[:128, 128:].set(0.0)
    x = jax.random.normal(k_x, (N, in_feats), dtype=jnp.float32)

    params = init_sage_params(k_p, in_feats, n_hidden, n_classes, n_layers)

    # Small tiles here so the test exercises both grid axes and block skipping;
    # real graphs should use the larger defaults (tm=512, tk=1024+, sweep tk).
    graph = prepare_graph(a, tm=128, tk=128)     # one-time preprocessing
    ref = sage_reference(a, x, params)

    out_dense = jax.block_until_ready(
        sage_forward(graph, x, params, block_sparse=False))
    out_bsr = jax.block_until_ready(
        sage_forward(graph, x, params, block_sparse=True))

    assert out_dense.shape == (N, n_classes), out_dense.shape
    assert out_bsr.shape == (N, n_classes), out_bsr.shape
    assert jnp.allclose(out_dense, ref, atol=2e-3, rtol=2e-3), \
        float(jnp.max(jnp.abs(out_dense - ref)))
    assert jnp.allclose(out_bsr, ref, atol=2e-3, rtol=2e-3), \
        float(jnp.max(jnp.abs(out_bsr - ref)))

    print("KERNEL_OK")
</pallas_src>

<mosaic_0001>
module attributes {stable_mosaic.version = 11 : i64} {
  func.func @_sage_layer_dense_kernel(%arg0: i32, %arg1: i32, %arg2: memref<128x128xi8, #tpu.memory_space<vmem>>, %arg3: memref<128x32xbf16, #tpu.memory_space<vmem>>, %arg4: memref<32x128xbf16, #tpu.memory_space<vmem>>, %arg5: memref<1x128xf32, #tpu.memory_space<vmem>>, %arg6: memref<128x1xf32, #tpu.memory_space<vmem>>, %arg7: memref<128x128xbf16, #tpu.memory_space<vmem>>, %arg8: memref<128x32xf32, #tpu.memory_space<vmem>>) attributes {dimension_semantics = [#tpu.dimension_semantics<parallel>, #tpu.dimension_semantics<arbitrary>], iteration_bounds = array<i64: 2, 2>, scalar_prefetch = 0 : i64, scratch_operands = 1 : i64, tpu.core_type = #tpu.core_type<tc>, window_params = [{transform_indices = @transform_0, window_bounds = array<i64: 128, 128>}, {transform_indices = @transform_1, window_bounds = array<i64: 128, 32>}, {pipeline_mode = #tpu.pipeline_mode<synchronous>, transform_indices = @transform_2, window_bounds = array<i64: 32, 128>}, {pipeline_mode = #tpu.pipeline_mode<synchronous>, transform_indices = @transform_3, window_bounds = array<i64: 1, 128>}, {transform_indices = @transform_4, window_bounds = array<i64: 128, 1>}, {transform_indices = @transform_5, window_bounds = array<i64: 128, 128>}]} {
    %c0_i32 = arith.constant 0 : i32
    %0 = arith.cmpi eq, %arg1, %c0_i32 : i32
    %1 = arith.extui %0 : i1 to i32
    %c0_i32_0 = arith.constant 0 : i32
    %2 = arith.cmpi ne, %1, %c0_i32_0 : i32
    scf.if %2 {
      %cst_9 = arith.constant 0.000000e+00 : f32
      %13 = vector.broadcast %cst_9 : f32 to vector<128x32xf32>
      %c0_10 = arith.constant 0 : index
      %c0_11 = arith.constant 0 : index
      %14 = vector.load %arg8[%c0_10, %c0_11] : memref<128x32xf32, #tpu.memory_space<vmem>>, vector<128x32xf32>
      tpu.vector_store %arg8[%c0_10, %c0_11], %13 {strides = array<i32>} : memref<128x32xf32, #tpu.memory_space<vmem>>, vector<128x32xf32>,
    } else {
    }
    %c0 = arith.constant 0 : index
    %c0_1 = arith.constant 0 : index
    %3 = vector.load %arg2[%c0, %c0_1] : memref<128x128xi8, #tpu.memory_space<vmem>>, vector<128x128xi8>
    %4 = arith.sitofp %3 : vector<128x128xi8> to vector<128x128xbf16>
    %c0_2 = arith.constant 0 : index
    %c0_3 = arith.constant 0 : index
    %5 = vector.load %arg8[%c0_2, %c0_3] : memref<128x32xf32, #tpu.memory_space<vmem>>, vector<128x32xf32>
    %c0_4 = arith.constant 0 : index
    %c0_5 = arith.constant 0 : index
    %6 = vector.load %arg3[%c0_4, %c0_5] : memref<128x32xbf16, #tpu.memory_space<vmem>>, vector<128x32xbf16>
    %cst = arith.constant dense<0.000000e+00> : vector<128x32xf32>
    %7 = tpu.matmul %4, %6, %cst {dimension_numbers = #tpu.dot_dimension_numbers<[1], [0], [0], [1], [0, 0, 1, 1], [], []>} : vector<128x128xbf16>, vector<128x32xbf16>, vector<128x32xf32> -> vector<128x32xf32>
    %8 = arith.addf %5, %7 : vector<128x32xf32>
    %c0_6 = arith.constant 0 : index
    %c0_7 = arith.constant 0 : index
    %9 = vector.load %arg8[%c0_6, %c0_7] : memref<128x32xf32, #tpu.memory_space<vmem>>, vector<128x32xf32>
    tpu.vector_store %arg8[%c0_6, %c0_7], %8 {strides = array<i32>} : memref<128x32xf32, #tpu.memory_space<vmem>>, vector<128x32xf32>,
    %c1_i32 = arith.constant 1 : i32
    %10 = arith.cmpi eq, %arg1, %c1_i32 : i32
    %11 = arith.extui %10 : i1 to i32
    %c0_i32_8 = arith.constant 0 : i32
    %12 = arith.cmpi ne, %11, %c0_i32_8 : i32
    scf.if %12 {
      %c0_9 = arith.constant 0 : index
      %c0_10 = arith.constant 0 : index
      %13 = vector.load %arg8[%c0_9, %c0_10] : memref<128x32xf32, #tpu.memory_space<vmem>>, vector<128x32xf32>
      %c0_11 = arith.constant 0 : index
      %c0_12 = arith.constant 0 : index
      %14 = vector.load %arg6[%c0_11, %c0_12] : memref<128x1xf32, #tpu.memory_space<vmem>>, vector<128x1xf32>
      %15 = vector.broadcast %14 : vector<128x1xf32> to vector<128x32xf32>
      %16 = arith.mulf %13, %15 : vector<128x32xf32>
      %17 = arith.truncf %16 : vector<128x32xf32> to vector<128x32xbf16>
      %c0_13 = arith.constant 0 : index
      %c0_14 = arith.constant 0 : index
      %18 = vector.load %arg4[%c0_13, %c0_14] : memref<32x128xbf16, #tpu.memory_space<vmem>>, vector<32x128xbf16>
      %cst_15 = arith.constant dense<0.000000e+00> : vector<128x128xf32>
      %19 = tpu.matmul %17, %18, %cst_15 {dimension_numbers = #tpu.dot_dimension_numbers<[1], [0], [0], [1], [0, 0, 1, 1], [], []>} : vector<128x32xbf16>, vector<32x128xbf16>, vector<128x128xf32> -> vector<128x128xf32>
      %c0_16 = arith.constant 0 : index
      %c0_17 = arith.constant 0 : index
      %20 = vector.load %arg5[%c0_16, %c0_17] : memref<1x128xf32, #tpu.memory_space<vmem>>, vector<1x128xf32>
      %21 = vector.broadcast %20 : vector<1x128xf32> to vector<128x128xf32>
      %22 = arith.addf %19, %21 : vector<128x128xf32>
      %cst_18 = arith.constant 0.000000e+00 : f32
      %23 = vector.broadcast %cst_18 : f32 to vector<128x128xf32>
      %24 = arith.maximumf %22, %23 : vector<128x128xf32>
      %25 = arith.truncf %24 : vector<128x128xf32> to vector<128x128xbf16>
      %c0_19 = arith.constant 0 : index
      %c0_20 = arith.constant 0 : index
      %26 = vector.load %arg7[%c0_19, %c0_20] : memref<128x128xbf16, #tpu.memory_space<vmem>>, vector<128x128xbf16>
      tpu.vector_store %arg7[%c0_19, %c0_20], %25 {strides = array<i32>} : memref<128x128xbf16, #tpu.memory_space<vmem>>, vector<128x128xbf16>,
    } else {
    }
    return
  }
  func.func @transform_0(%arg0: i32, %arg1: i32) -> (i32, i32) {
    %c0_i32 = arith.constant 0 : i32
    return %arg0, %arg1 : i32, i32
  }
  func.func @transform_1(%arg0: i32, %arg1: i32) -> (i32, i32) {
    %c0_i32 = arith.constant 0 : i32
    %c0_i32_0 = arith.constant 0 : i32
    return %arg1, %c0_i32 : i32, i32
  }
  func.func @transform_2(%arg0: i32, %arg1: i32) -> (i32, i32) {
    %c0_i32 = arith.constant 0 : i32
    %c0_i32_0 = arith.constant 0 : i32
    %c0_i32_1 = arith.constant 0 : i32
    return %c0_i32, %c0_i32_0 : i32, i32
  }
  func.func @transform_3(%arg0: i32, %arg1: i32) -> (i32, i32) {
    %c0_i32 = arith.constant 0 : i32
    %c0_i32_0 = arith.constant 0 : i32
    %c0_i32_1 = arith.constant 0 : i32
    return %c0_i32, %c0_i32_0 : i32, i32
  }
  func.func @transform_4(%arg0: i32, %arg1: i32) -> (i32, i32) {
    %c0_i32 = arith.constant 0 : i32
    %c0_i32_0 = arith.constant 0 : i32
    return %arg0, %c0_i32 : i32, i32
  }
  func.func @transform_5(%arg0: i32, %arg1: i32) -> (i32, i32) {
    %c0_i32 = arith.constant 0 : i32
    %c0_i32_0 = arith.constant 0 : i32
    return %arg0, %c0_i32 : i32, i32
  }
}

</mosaic_0001>

<llo_original>
// kernel: tpu_custom_call.1
$region0: #{tpu_custom_call.1}
  #allocation0 [shape = 'u32[]', space=smem, size = 0x4, offset = 0x4, fixed_abs, tag = 'smem constant byte address 0x4 - core index']
  #allocation1 [shape = 'u32[144,128]{1,0:T(1,128)}', space=vmem, size = 0x12000, scoped, tag = 'internal scratch']
  #allocation2 [shape = 'f32[128,32]{1,0:T(8,128)}', space=vmem, size = 0x10000, scoped, tag = 'scratch operand']
  %s0 = inlined_call_operand.vmem [shape: s8[256,256], index: 0, kind: input, shape index: {}]
  %s1 = inlined_call_operand.vmem [shape: bf16[256,32], index: 1, kind: input, shape index: {}]
  %s2 = inlined_call_operand.vmem [shape: bf16[32,128], index: 2, kind: input, shape index: {}]
  %s3 = inlined_call_operand.vmem [shape: f32[1,128], index: 3, kind: input, shape index: {}]
  %s4 = inlined_call_operand.vmem [shape: f32[256,1], index: 4, kind: input, shape index: {}]
  %s5 = inlined_call_operand.hbm [shape: bf16[256,128], index: 5, kind: output, shape index: {}]
  %s6 = sld [smem:[#allocation0]]
  $region99: #{tpu_custom_call.1} parent=0
    _
  %s8 = ssub.s32 1, %s6
  %s9 = scalar_select 0, %s8, %s6
  $region1: #{tpu_custom_call.1} parent=0
    #allocation3 [shape = 'u8[32768]{0}', space=vmem, size = 0x8000, scoped, tag = 'input window, operand 0']
    #allocation4 [shape = 'u8[65536]{0}', space=vmem, size = 0x10000, scoped, tag = 'output window, operand 0']
    #allocation5 [shape = 's32[2]{0}', space=sflag, size = 0x8, scoped, tag = 'scoped memory for tpu_custom_call.1']
    %10 = vsyncpa [#allocation5], 0
    %s11 = scalar_lea.sflag [#allocation5], 1
    %12 = vsyncpa %s11, 0
    loop: start=0, step=1, limit=6
    $region2: #{tpu_custom_call.1} parent=1 // loop_pre_header
      _
    $region3: #{tpu_custom_call.1} parent=1 // loop_header
      %s14 = sphi 0, %s18
      %p15 = scmp.ge.s32.totalorder %s14, 6
      %s21 = sphi 0, %s33
      %s22 = sphi 0, %s29
      %s23 = sphi 0, %s21
      %s24 = sphi 0, %s22
      %s25 = sphi 0, %s23
      %s26 = sphi 0, %s24
      %s38 = sphi 0, %s40
      %s41 = sphi 0, %s38
      %s42 = sphi 0, %s41
      %s58 = sphi 0, %s42
      %s64 = sphi 0, %s66
      %s67 = sphi 0, %s64
      %s68 = sphi 0, %s67
      %s84 = sphi 0, %s68
      %s88 = sphi 0, %s88
      %s90 = sphi 0, %s88
      %s91 = sphi 0, %s90
      %s105 = sphi 0, %s91
      %s109 = sphi 0, %s109
      %s111 = sphi 0, %s109
      %s112 = sphi 0, %s111
      %s126 = sphi 0, %s112
      %s132 = sphi 0, %s134
      %s135 = sphi 0, %s132
      %s136 = sphi 0, %s135
      %s152 = sphi 0, %s136
      %s158 = sphi 0, %s160
      %s161 = sphi 0, %s158
      %s162 = sphi 0, %s161
      %s178 = sphi 0, %s162
    $region4: #{tpu_custom_call.1} parent=1 // loop_header_branch
      %17 = sbr.rel (%p15) target = $region8
    $region5: #{tpu_custom_call.1} parent=1 // loop_body
      %s19 = ssub.s32 %s14, 1
      %s20 = ssub.s32 %s14, 2
      %s27 = sadd.s32 1, %s22
      %p28 = scmp.ge.s32.totalorder %s27, 2
      %s29 = scalar_select %p28, 0, %s27
      %s30 = sadd.s32 1, %s21
      %s31 = scalar_select %p28, %s30, %s21
      %p32 = scmp.ge.s32.totalorder %s31, 2
      %s33 = scalar_select %p32, 0, %s31
      %s34 = ssub.s32 %s21, %s33
      %s35 = ssub.s32 %s22, %s29
      %s36 = sor.u32 %s34, %s35
      %p37 = scmp.eq.s32.totalorder %s36, 0
      %s39 = sadd.s32 %s38, 1
      %s40 = scalar_select %p37, %s38, %s39
      %p43 = pneg %p37
      %p44 = scmp.eq.s32.totalorder %s14, 3
      %p45 = por %p43, %p44
      %p46 = scmp.ne.s32.totalorder %s38, %s41
      %p47 = scmp.eq.s32.totalorder %s14, 0
      %p48 = por %p46, %p47
      %p49 = scmp.ne.s32.totalorder %s38, %s41
      %p50 = scmp.eq.s32.totalorder %s19, 3
      %p51 = por %p49, %p50
      %p52 = scmp.ne.s32.totalorder %s41, %s42
      %p53 = scmp.eq.s32.totalorder %s19, 0
      %p54 = por %p52, %p53
      %p55 = scmp.ne.s32.totalorder %s41, %s42
      %p56 = scmp.eq.s32.totalorder %s20, 3
      %p57 = por %p55, %p56
      %p59 = scmp.ne.s32.totalorder %s42, %s58
      %p60 = scmp.eq.s32.totalorder %s20, 0
      %p61 = por %p59, %p60
      %s62 = ssub.s32 %s22, %s29
      %p63 = scmp.eq.s32.totalorder %s62, 0
      %s65 = sadd.s32 %s64, 1
      %s66 = scalar_select %p63, %s64, %s65
      %p69 = pneg %p63
      %p70 = scmp.eq.s32.totalorder %s14, 3
      %p71 = por %p69, %p70
      %p72 = scmp.ne.s32.totalorder %s64, %s67
      %p73 = scmp.eq.s32.totalorder %s14, 0
      %p74 = por %p72, %p73
      %p75 = scmp.ne.s32.totalorder %s64, %s67
      %p76 = scmp.eq.s32.totalorder %s19, 3
      %p77 = por %p75, %p76
      %p78 = scmp.ne.s32.totalorder %s67, %s68
      %p79 = scmp.eq.s32.totalorder %s19, 0
      %p80 = por %p78, %p79
      %p81 = scmp.ne.s32.totalorder %s67, %s68
      %p82 = scmp.eq.s32.totalorder %s20, 3
      %p83 = por %p81, %p82
      %p85 = scmp.ne.s32.totalorder %s68, %s84
      %p86 = scmp.eq.s32.totalorder %s20, 0
      %p87 = por %p85, %p86
      %s89 = sadd.s32 %s88, 1
      %p92 = scmp.eq.s32.totalorder %s14, 3
      %p93 = scmp.ne.s32.totalorder %s88, %s90
      %p94 = scmp.eq.s32.totalorder %s14, 0
      %p95 = por %p93, %p94
      %p96 = scmp.ne.s32.totalorder %s88, %s90
      %p97 = scmp.eq.s32.totalorder %s19, 3
      %p98 = por %p96, %p97
      %p99 = scmp.ne.s32.totalorder %s90, %s91
      %p100 = scmp.eq.s32.totalorder %s19, 0
      %p101 = por %p99, %p100
      %p102 = scmp.ne.s32.totalorder %s90, %s91
      %p103 = scmp.eq.s32.totalorder %s20, 3
      %p104 = por %p102, %p103
      %p106 = scmp.ne.s32.totalorder %s91, %s105
      %p107 = scmp.eq.s32.totalorder %s20, 0
      %p108 = por %p106, %p107
      %s110 = sadd.s32 %s109, 1
      %p113 = scmp.eq.s32.totalorder %s14, 3
      %p114 = scmp.ne.s32.totalorder %s109, %s111
      %p115 = scmp.eq.s32.totalorder %s14, 0
      %p116 = por %p114, %p115
      %p117 = scmp.ne.s32.totalorder %s109, %s111
      %p118 = scmp.eq.s32.totalorder %s19, 3
      %p119 = por %p117, %p118
      %p120 = scmp.ne.s32.totalorder %s111, %s112
      %p121 = scmp.eq.s32.totalorder %s19, 0
      %p122 = por %p120, %p121
      %p123 = scmp.ne.s32.totalorder %s111, %s112
      %p124 = scmp.eq.s32.totalorder %s20, 3
      %p125 = por %p123, %p124
      %p127 = scmp.ne.s32.totalorder %s112, %s126
      %p128 = scmp.eq.s32.totalorder %s20, 0
      %p129 = por %p127, %p128
      %s130 = ssub.s32 %s21, %s33
      %p131 = scmp.eq.s32.totalorder %s130, 0
      %s133 = sadd.s32 %s132, 1
      %s134 = scalar_select %p131, %s132, %s133
      %p137 = pneg %p131
      %p138 = scmp.eq.s32.totalorder %s14, 3
      %p139 = por %p137, %p138
      %p140 = scmp.ne.s32.totalorder %s132, %s135
      %p141 = scmp.eq.s32.totalorder %s14, 0
      %p142 = por %p140, %p141
      %p143 = scmp.ne.s32.totalorder %s132, %s135
      %p144 = scmp.eq.s32.totalorder %s19, 3
      %p145 = por %p143, %p144
      %p146 = scmp.ne.s32.totalorder %s135, %s136
      %p147 = scmp.eq.s32.totalorder %s19, 0
      %p148 = por %p146, %p147
      %p149 = scmp.ne.s32.totalorder %s135, %s136
      %p150 = scmp.eq.s32.totalorder %s20, 3
      %p151 = por %p149, %p150
      %p153 = scmp.ne.s32.totalorder %s136, %s152
      %p154 = scmp.eq.s32.totalorder %s20, 0
      %p155 = por %p153, %p154
      %s156 = ssub.s32 %s21, %s33
      %p157 = scmp.eq.s32.totalorder %s156, 0
      %s159 = sadd.s32 %s158, 1
      %s160 = scalar_select %p157, %s158, %s159
      %p163 = pneg %p157
      %p164 = scmp.eq.s32.totalorder %s14, 3
      %p165 = por %p163, %p164
      %p166 = scmp.ne.s32.totalorder %s158, %s161
      %p167 = scmp.eq.s32.totalorder %s14, 0
      %p168 = por %p166, %p167
      %p169 = scmp.ne.s32.totalorder %s158, %s161
      %p170 = scmp.eq.s32.totalorder %s19, 3
      %p171 = por %p169, %p170
      %p172 = scmp.ne.s32.totalorder %s161, %s162
      %p173 = scmp.eq.s32.totalorder %s19, 0
      %p174 = por %p172, %p173
      %p175 = scmp.ne.s32.totalorder %s161, %s162
      %p176 = scmp.eq.s32.totalorder %s20, 3
      %p177 = por %p175, %p176
      %p179 = scmp.ne.s32.totalorder %s162, %s178
      %p180 = scmp.eq.s32.totalorder %s20, 0
      %p181 = por %p179, %p180
      %p182 = scmp.le.s32.totalorder 1, %s14
      %p183 = scmp.lt.s32.totalorder %s14, 5
      %p184 = pnand %p182, %p183
      %p185 = pneg %p184
      // Predicated region
      $region9: #{tpu_custom_call.1} parent=5 // pred_check
        _
      $region10: #{tpu_custom_call.1} parent=5 // pred_check_branch
        %187 = sbr.rel (%p184) target = $region12
      $region11: #{tpu_custom_call.1} parent=5 // pred_region
        %s188 = ssub.s32 %s14, 1
        // Predicated region
        $region13: #{tpu_custom_call.1} parent=11 // pred_check
          %p189 = pneg %p101
        $region14: #{tpu_custom_call.1} parent=11 // pred_check_branch
          %191 = sbr.rel (%p189) target = $region16
        $region15: #{tpu_custom_call.1} parent=11 // pred_region
          _
        $region16: #{tpu_custom_call.1} parent=11 // pred_fallthru
          _
        // Predicated region
        $region17: #{tpu_custom_call.1} parent=11 // pred_check
          %p192 = pneg %p122
        $region18: #{tpu_custom_call.1} parent=11 // pred_check_branch
          %194 = sbr.rel (%p192) target = $region20
        $region19: #{tpu_custom_call.1} parent=11 // pred_region
          _
        $region20: #{tpu_custom_call.1} parent=11 // pred_fallthru
          _
      $region12: #{tpu_custom_call.1} parent=5 // pred_fallthru
        _
      %p195 = scmp.lt.s32.totalorder %s14, 4
      // Predicated region
      $region21: #{tpu_custom_call.1} parent=5 // pred_check
        %p196 = pneg %p195
      $region22: #{tpu_custom_call.1} parent=5 // pred_check_branch
        %198 = sbr.rel (%p196) target = $region24
      $region23: #{tpu_custom_call.1} parent=5 // pred_region
        // Predicated region
        $region25: #{tpu_custom_call.1} parent=23 // pred_check
          %p199 = pneg %p48
        $region26: #{tpu_custom_call.1} parent=23 // pred_check_branch
          %201 = sbr.rel (%p199) target = $region28
        $region27: #{tpu_custom_call.1} parent=23 // pred_region
          %s202 = sand.u32 %s38, 1
          %s203 = sand.u32 %s38, 1
          %s204 = smul.addr %s203, 32
          %s205 = scalar_lea.vmem [#allocation3], %s204
          %s206 = smul.u32 4, %s21
          %s207 = smul.addr %s206, 2
          %s208 = sadd.s32 %s22, %s207
          %s209 = smul.addr %s208, 8
          %s210 = scalar_lea.vmem %s0, %s209
          // Predicated region
          $region29: #{tpu_custom_call.1} parent=27 // pred_check
            _
          $region30: #{tpu_custom_call.1} parent=27 // pred_check_branch
            %212 = sbr.rel (0) target = $region32
          $region31: #{tpu_custom_call.1} parent=27 // pred_region
            // Predicated region
            $region33: #{tpu_custom_call.1} parent=31 // pred_check
              _
            $region34: #{tpu_custom_call.1} parent=31 // pred_check_branch
              %214 = sbr.rel (0) target = $region36
            $region35: #{tpu_custom_call.1} parent=31 // pred_region
              // Predicated region
              $region48: #{tpu_custom_call.1} parent=35 // pred_check
                _
              $region49: #{tpu_custom_call.1} parent=35 // pred_check_branch
                %235 = sbr.rel (0) target = $region51
              $region50: #{tpu_custom_call.1} parent=35 // pred_region
                loop: start=0, step=1, limit=1
                $region52: #{tpu_custom_call.1} parent=50 // loop_pre_header
                  _
                $region53: #{tpu_custom_call.1} parent=50 // loop_header
                  %s237 = sphi 0, %s241
                  %p238 = scmp.ge.s32.totalorder %s237, 1
                  %s242 = sphi %s210, %s210
                  %s243 = sphi %s205, %s205
                $region54: #{tpu_custom_call.1} parent=50 // loop_header_branch
                  %240 = sbr.rel (%p238) target = $region58
                $region55: #{tpu_custom_call.1} parent=50 // loop_body
                  %v244 = vld [vmem:[%s242] sm:$0xff]
                  %245 = vst [vmem:[%s243] sm:$0xff] %v244
                  %v246 = vld [vmem:[%s242 + $0x10] sm:$0xff]
                  %247 = vst [vmem:[%s243 + $0x8] sm:$0xff] %v246
                  %v248 = vld [vmem:[%s242 + $0x20] sm:$0xff]
                  %249 = vst [vmem:[%s243 + $0x10] sm:$0xff] %v248
                  %v250 = vld [vmem:[%s242 + $0x30] sm:$0xff]
                  %251 = vst [vmem:[%s243 + $0x18] sm:$0xff] %v250
                $region56: #{tpu_custom_call.1} parent=50 // loop_footer
                  %s241 = sadd.s32 1, %s237
                $region57: #{tpu_custom_call.1} parent=50 // loop_footer_branch
                  %236 = sbr.rel target = $region53
                $region58: #{tpu_custom_call.1} parent=50 // loop_exit
                  _
              $region51: #{tpu_custom_call.1} parent=35 // pred_fallthru
                _
              // Predicated region
              $region59: #{tpu_custom_call.1} parent=35 // pred_check
                _
              $region60: #{tpu_custom_call.1} parent=35 // pred_check_branch
                %253 = sbr.rel target = $region62
              $region61: #{tpu_custom_call.1} parent=35 // pred_region
                _
              $region62: #{tpu_custom_call.1} parent=35 // pred_fallthru
                _
            $region36: #{tpu_custom_call.1} parent=31 // pred_fallthru
              _
            // Predicated region
            $region37: #{tpu_custom_call.1} parent=31 // pred_check
              _
            $region38: #{tpu_custom_call.1} parent=31 // pred_check_branch
              %216 = sbr.rel target = $region40
            $region39: #{tpu_custom_call.1} parent=31 // pred_region
              loop: start=0, step=1, limit=1
              $region41: #{tpu_custom_call.1} parent=39 // loop_pre_header
                _
              $region42: #{tpu_custom_call.1} parent=39 // loop_header
                %s219 = sphi 0, %s223
                %p220 = scmp.ge.s32.totalorder %s219, 1
                %s224 = sphi %s210, %s210
                %s225 = sphi %s205, %s205
              $region43: #{tpu_custom_call.1} parent=39 // loop_header_branch
                %222 = sbr.rel (%p220) target = $region47
              $region44: #{tpu_custom_call.1} parent=39 // loop_body
                %v226 = vld [vmem:[%s224] sm:$0xff]
                %227 = vst [vmem:[%s225] sm:$0xff] %v226
                %v228 = vld [vmem:[%s224 + $0x10] sm:$0xff]
                %229 = vst [vmem:[%s225 + $0x8] sm:$0xff] %v228
                %v230 = vld [vmem:[%s224 + $0x20] sm:$0xff]
                %231 = vst [vmem:[%s225 + $0x10] sm:$0xff] %v230
                %v232 = vld [vmem:[%s224 + $0x30] sm:$0xff]
                %233 = vst [vmem:[%s225 + $0x18] sm:$0xff] %v232
              $region45: #{tpu_custom_call.1} parent=39 // loop_footer
                %s223 = sadd.s32 1, %s219
              $region46: #{tpu_custom_call.1} parent=39 // loop_footer_branch
                %218 = sbr.rel target = $region42
              $region47: #{tpu_custom_call.1} parent=39 // loop_exit
                _
            $region40: #{tpu_custom_call.1} parent=31 // pred_fallthru
              _
          $region32: #{tpu_custom_call.1} parent=27 // pred_fallthru
            _
          %254 = vnop
        $region28: #{tpu_custom_call.1} parent=23 // pred_fallthru
          _
        // Predicated region
        $region63: #{tpu_custom_call.1} parent=23 // pred_check
          %p255 = pneg %p74
        $region64: #{tpu_custom_call.1} parent=23 // pred_check_branch
          %257 = sbr.rel (%p255) target = $region66
        $region65: #{tpu_custom_call.1} parent=23 // pred_region
          %s258 = smul.u32 16, %s22
          %p259 = scmp.lt.s32.totalorder %s258, 31
          %s260 = scalar_select %p259, %s258, 31
          %s261 = smul.addr %s260, 4
          %s262 = scalar_lea.vmem %s1, %s261
          %s263 = smul.u32 16, %s22
        $region66: #{tpu_custom_call.1} parent=23 // pred_fallthru
          _
        // Predicated region
        $region67: #{tpu_custom_call.1} parent=23 // pred_check
          %p264 = pneg %p142
        $region68: #{tpu_custom_call.1} parent=23 // pred_check_branch
          %266 = sbr.rel (%p264) target = $region70
        $region69: #{tpu_custom_call.1} parent=23 // pred_region
          %s267 = smul.u32 16, %s21
          %p268 = scmp.lt.s32.totalorder %s267, 31
          %s269 = scalar_select %p268, %s267, 31
          %s270 = smul.addr %s269, 8
          %s271 = scalar_lea.vmem %s4, %s270
          %s272 = smul.u32 16, %s21
        $region70: #{tpu_custom_call.1} parent=23 // pred_fallthru
          _
      $region24: #{tpu_custom_call.1} parent=5 // pred_fallthru
        _
      %p273 = scmp.le.s32.totalorder 1, %s14
      %p274 = scmp.lt.s32.totalorder %s14, 5
      %p275 = pnand %p273, %p274
      %p276 = pneg %p275
      // Predicated region
      $region71: #{tpu_custom_call.1} parent=5 // pred_check
        _
      $region72: #{tpu_custom_call.1} parent=5 // pred_check_branch
        %278 = sbr.rel (%p275) target = $region74
      $region73: #{tpu_custom_call.1} parent=5 // pred_region
        %s279 = ssub.s32 %s14, 1
        %s280 = sand.u32 %s41, 1
        %s281 = sand.u32 %s41, 1
        %s282 = smul.addr %s281, 32
        %s283 = scalar_lea.vmem [#allocation3], %s282
        // Predicated region
        $region75: #{tpu_custom_call.1} parent=73 // pred_check
          %p284 = pneg %p54
        $region76: #{tpu_custom_call.1} parent=73 // pred_check_branch
          %286 = sbr.rel (%p284) target = $region78
        $region77: #{tpu_custom_call.1} parent=73 // pred_region
          _
        $region78: #{tpu_custom_call.1} parent=73 // pred_fallthru
          _
        %s287 = sand.u32 %s41, 1
        %s288 = sand.u32 %s41, 1
        %s289 = smul.addr %s288, 32
        %s290 = scalar_lea.vmem [#allocation3], %s289
        %p291 = pneg %p54
        %p292 = pneg %p51
        %s293 = smul.u32 16, %s24
        %p294 = scmp.lt.s32.totalorder %s293, 31
        %s295 = scalar_select %p294, %s293, 31
        %s296 = smul.addr %s295, 4
        %s297 = scalar_lea.vmem %s1, %s296
        %p298 = pneg %p80
        %p299 = pneg %p77
        %p300 = pneg %p101
        %p301 = pneg %p98
        %p302 = pneg %p122
        %p303 = pneg %p119
        %s304 = smul.u32 16, %s23
        %p305 = scmp.lt.s32.totalorder %s304, 31
        %s306 = scalar_select %p305, %s304, 31
        %s307 = smul.addr %s306, 8
        %s308 = scalar_lea.vmem %s4, %s307
        %p309 = pneg %p148
        %p310 = pneg %p145
        %p311 = pneg %p174
        %p312 = pneg %p171
        %s313 = sand.u32 %s161, 1
        %s314 = scalar_lea.sflag [#allocation5], %s313
        %s315 = sand.u32 %s161, 1
        %s316 = smul.addr %s315, 64
        %s317 = scalar_lea.vmem [#allocation4], %s316
        %s318 = smul.u32 4, %s23
        %s319 = smul.u32 16, %s24
        %p320 = scmp.lt.s32.totalorder %s319, 31
        %s321 = scalar_select %p320, %s319, 31
        %s322 = smul.addr %s321, 4
        %s323 = scalar_lea.vmem %s1, %s322
        %s324 = smul.u32 16, %s24
        %s325 = smul.u32 16, %s23
        %p326 = scmp.lt.s32.totalorder %s325, 31
        %s327 = scalar_select %p326, %s325, 31
        %s328 = smul.addr %s327, 8
        %s329 = scalar_lea.vmem %s4, %s328
        %s330 = smul.u32 16, %s23
        %s331 = smul.u32 16, %s23
        %p333 = scmp.eq.s32.totalorder %s24, 0
        // Predicated region
        $region79: #{tpu_custom_call.1} parent=73 // pred_check
          %p334 = pneg %p333
        $region80: #{tpu_custom_call.1} parent=73 // pred_check_branch
          %336 = sbr.rel (%p334) target = $region82
        $region81: #{tpu_custom_call.1} parent=73 // pred_region
          %vm337 = vcmask 261120
          %338 = vst.msk [vmem:[#allocation2] sm:$0xff] %vm337, 0.0
          %339 = vst.msk [vmem:[#allocation2 + $0x8] sm:$0xff] %vm337, 0.0
          %340 = vst.msk [vmem:[#allocation2 + $0x10] sm:$0xff] %vm337, 0.0
          %341 = vst.msk [vmem:[#allocation2 + $0x18] sm:$0xff] %vm337, 0.0
          %342 = vst.msk [vmem:[#allocation2 + $0x20] sm:$0xff] %vm337, 0.0
          %343 = vst.msk [vmem:[#allocation2 + $0x28] sm:$0xff] %vm337, 0.0
          %344 = vst.msk [vmem:[#allocation2 + $0x30] sm:$0xff] %vm337, 0.0
          %345 = vst.msk [vmem:[#allocation2 + $0x38] sm:$0xff] %vm337, 0.0
          %346 = vst.msk [vmem:[#allocation2 + $0x40] sm:$0xff] %vm337, 0.0
          %347 = vst.msk [vmem:[#allocation2 + $0x48] sm:$0xff] %vm337, 0.0
          %348 = vst.msk [vmem:[#allocation2 + $0x50] sm:$0xff] %vm337, 0.0
          %349 = vst.msk [vmem:[#allocation2 + $0x58] sm:$0xff] %vm337, 0.0
          %350 = vst.msk [vmem:[#allocation2 + $0x60] sm:$0xff] %vm337, 0.0
          %351 = vst.msk [vmem:[#allocation2 + $0x68] sm:$0xff] %vm337, 0.0
          %352 = vst.msk [vmem:[#allocation2 + $0x70] sm:$0xff] %vm337, 0.0
          %353 = vst.msk [vmem:[#allocation2 + $0x78] sm:$0xff] %vm337, 0.0
        $region82: #{tpu_custom_call.1} parent=73 // pred_fallthru
          _
        %v354 = vld [vmem:[%s283] sm:$0xff]
        %v355 = vld [vmem:[%s283 + $0x8] sm:$0xff]
        %v356 = vld [vmem:[%s283 + $0x10] sm:$0xff]
        %v357 = vld [vmem:[%s283 + $0x18] sm:$0xff]
        %v358 = vunpack.c.l.s8.bf16 %v354
        %v359 = vunpack.c.h.s8.bf16 %v354
        %v360 = vunpack.c.l.s8.bf16 %v355
        %v361 = vunpack.c.h.s8.bf16 %v355
        %v362 = vunpack.c.l.s8.bf16 %v356
        %v363 = vunpack.c.h.s8.bf16 %v356
        %v364 = vunpack.c.l.s8.bf16 %v357
        %v365 = vunpack.c.h.s8.bf16 %v357
        %v366 = vld [vmem:[#allocation2] sm:$0xff]
        %v367 = vld [vmem:[#allocation2 + $0x8] sm:$0xff]
        %v368 = vld [vmem:[#allocation2 + $0x10] sm:$0xff]
        %v369 = vld [vmem:[#allocation2 + $0x18] sm:$0xff]
        %v370 = vld [vmem:[#allocation2 + $0x20] sm:$0xff]
        %v371 = vld [vmem:[#allocation2 + $0x28] sm:$0xff]
        %v372 = vld [vmem:[#allocation2 + $0x30] sm:$0xff]
        %v373 = vld [vmem:[#allocation2 + $0x38] sm:$0xff]
        %v374 = vld [vmem:[#allocation2 + $0x40] sm:$0xff]
        %v375 = vld [vmem:[#allocation2 + $0x48] sm:$0xff]
        %v376 = vld [vmem:[#allocation2 + $0x50] sm:$0xff]
        %v377 = vld [vmem:[#allocation2 + $0x58] sm:$0xff]
        %v378 = vld [vmem:[#allocation2 + $0x60] sm:$0xff]
        %v379 = vld [vmem:[#allocation2 + $0x68] sm:$0xff]
        %v380 = vld [vmem:[#allocation2 + $0x70] sm:$0xff]
        %v381 = vld [vmem:[#allocation2 + $0x78] sm:$0xff]
        %v382 = vld [vmem:[%s323] sm:$0xf]
        %v383 = vld [vmem:[%s323 + $0x4] sm:$0xf]
        %v384 = vld [vmem:[%s323 + $0x8] sm:$0xf]
        %v385 = vld [vmem:[%s323 + $0xc] sm:$0xf]
        %v386 = vld [vmem:[%s323 + $0x10] sm:$0xf]
        %v387 = vld [vmem:[%s323 + $0x14] sm:$0xf]
        %v388 = vld [vmem:[%s323 + $0x18] sm:$0xf]
        %v389 = vld [vmem:[%s323 + $0x1c] sm:$0xf]
        %v390 = vld [vmem:[%s323 + $0x20] sm:$0xf]
        %v391 = vld [vmem:[%s323 + $0x24] sm:$0xf]
        %v392 = vld [vmem:[%s323 + $0x28] sm:$0xf]
        %v393 = vld [vmem:[%s323 + $0x2c] sm:$0xf]
        %v394 = vld [vmem:[%s323 + $0x30] sm:$0xf]
        %v395 = vld [vmem:[%s323 + $0x34] sm:$0xf]
        %v396 = vld [vmem:[%s323 + $0x38] sm:$0xf]
        %v397 = vld [vmem:[%s323 + $0x3c] sm:$0xf]
        %v414 = vunpack.c.l.b16 %v382
        %v415 = vunpack.c.l.b16 %v383
        %v416 = vunpack.c.l.b16 %v384
        %v417 = vunpack.c.l.b16 %v385
        %v418 = vunpack.c.l.b16 %v386
        %v419 = vunpack.c.l.b16 %v387
        %v420 = vunpack.c.l.b16 %v388
        %v421 = vunpack.c.l.b16 %v389
        %v422 = vunpack.c.l.b16 %v390
        %v423 = vunpack.c.l.b16 %v391
        %v424 = vunpack.c.l.b16 %v392
        %v425 = vunpack.c.l.b16 %v393
        %v426 = vunpack.c.l.b16 %v394
        %v427 = vunpack.c.l.b16 %v395
        %v428 = vunpack.c.l.b16 %v396
        %v429 = vunpack.c.l.b16 %v397
        %v430 = vpack.c.b16 %v415, %v414
        %v431 = vpack.c.b16 %v417, %v416
        %v432 = vpack.c.b16 %v419, %v418
        %v433 = vpack.c.b16 %v421, %v420
        %v434 = vpack.c.b16 %v423, %v422
        %v435 = vpack.c.b16 %v425, %v424
        %v436 = vpack.c.b16 %v427, %v426
        %v437 = vpack.c.b16 %v429, %v428
        %446 = vmatprep.subr.bf16.mxu0 0
        %447 = vmatpush1.bf16.msra.mxu0 %v430
        %448 = vmatprep.subr.bf16.mxu0 0
        %449 = vmatpush1.bf16.msra.mxu0 %v431
        %450 = vmatprep.subr.bf16.mxu0 0
        %451 = vmatpush1.bf16.msra.mxu0 %v432
        %452 = vmatprep.subr.bf16.mxu0 0
        %453 = vmatpush1.bf16.msra.mxu0 %v433
        %454 = vmatprep.subr.bf16.mxu0 0
        %455 = vmatpush1.bf16.msra.mxu0 %v434
        %456 = vmatprep.subr.bf16.mxu0 0
        %457 = vmatpush1.bf16.msra.mxu0 %v435
        %458 = vmatprep.subr.bf16.mxu0 0
        %459 = vmatpush1.bf16.msra.mxu0 %v436
        %460 = vmatprep.subr.bf16.mxu0 0
        %461 = vmatpush1.bf16.msra.mxu0 %v437
        %462 = vmatprep.subr.bf16.mxu0 0
        %463 = vmatpush1.bf16.msra.mxu0 0
        %464 = vmatprep.subr.bf16.mxu0 0
        %465 = vmatpush1.bf16.msra.mxu0 0
        %466 = vmatprep.subr.bf16.mxu0 0
        %467 = vmatpush1.bf16.msra.mxu0 0
        %468 = vmatprep.subr.bf16.mxu0 0
        %469 = vmatpush1.bf16.msra.mxu0 0
        %470 = vmatprep.subr.bf16.mxu0 0
        %471 = vmatpush1.bf16.msra.mxu0 0
        %472 = vmatprep.subr.bf16.mxu0 0
        %473 = vmatpush1.bf16.msra.mxu0 0
        %474 = vmatprep.subr.bf16.mxu0 0
        %475 = vmatpush1.bf16.msra.mxu0 0
        %476 = vmatprep.subr.bf16.mxu0 0
        %477 = vmatpush1.bf16.msra.mxu0 0
        %478 = vmatprep.mubr.bf16.mxu0 0
        %479 = vmatmul.mubr.bf16.gmra.mrb[0].mxu0 %v358
        %v480 = vpop.f32.mrb[0].mxu0
        %v481 = vadd.f32 0.0, %v480
        %v482 = vpop.f32.mrb[0].mxu0
        %v483 = vpop.f32.mrb[0].mxu0
        %v484 = vadd.f32 0.0, %v483
        %v485 = vpop.f32.mrb[0].mxu0
        %486 = vmatprep.mubr.bf16.mxu0 0
        %487 = vmatmul.mubr.bf16.gmra.mrb[0].mxu0 %v359
        %v488 = vpop.f32.mrb[0].mxu0
        %v489 = vadd.f32 0.0, %v488
        %v490 = vpop.f32.mrb[0].mxu0
        %v491 = vpop.f32.mrb[0].mxu0
        %v492 = vadd.f32 0.0, %v491
        %v493 = vpop.f32.mrb[0].mxu0
        %494 = vmatprep.mubr.bf16.mxu0 0
        %495 = vmatmul.mubr.bf16.gmra.mrb[0].mxu0 %v360
        %v496 = vpop.f32.mrb[0].mxu0
        %v497 = vadd.f32 0.0, %v496
        %v498 = vpop.f32.mrb[0].mxu0
        %v499 = vpop.f32.mrb[0].mxu0
        %v500 = vadd.f32 0.0, %v499
        %v501 = vpop.f32.mrb[0].mxu0
        %502 = vmatprep.mubr.bf16.mxu0 0
        %503 = vmatmul.mubr.bf16.gmra.mrb[0].mxu0 %v361
        %v504 = vpop.f32.mrb[0].mxu0
        %v505 = vadd.f32 0.0, %v504
        %v506 = vpop.f32.mrb[0].mxu0
        %v507 = vpop.f32.mrb[0].mxu0
        %v508 = vadd.f32 0.0, %v507
        %v509 = vpop.f32.mrb[0].mxu0
        %510 = vmatprep.mubr.bf16.mxu0 0
        %511 = vmatmul.mubr.bf16.gmra.mrb[0].mxu0 %v362
        %v512 = vpop.f32.mrb[0].mxu0
        %v513 = vadd.f32 0.0, %v512
        %v514 = vpop.f32.mrb[0].mxu0
        %v515 = vpop.f32.mrb[0].mxu0
        %v516 = vadd.f32 0.0, %v515
        %v517 = vpop.f32.mrb[0].mxu0
        %518 = vmatprep.mubr.bf16.mxu0 0
        %519 = vmatmul.mubr.bf16.gmra.mrb[0].mxu0 %v363
        %v520 = vpop.f32.mrb[0].mxu0
        %v521 = vadd.f32 0.0, %v520
        %v522 = vpop.f32.mrb[0].mxu0
        %v523 = vpop.f32.mrb[0].mxu0
        %v524 = vadd.f32 0.0, %v523
        %v525 = vpop.f32.mrb[0].mxu0
        %526 = vmatprep.mubr.bf16.mxu0 0
        %527 = vmatmul.mubr.bf16.gmra.mrb[0].mxu0 %v364
        %v528 = vpop.f32.mrb[0].mxu0
        %v529 = vadd.f32 0.0, %v528
        %v530 = vpop.f32.mrb[0].mxu0
        %v531 = vpop.f32.mrb[0].mxu0
        %v532 = vadd.f32 0.0, %v531
        %v533 = vpop.f32.mrb[0].mxu0
        %534 = vmatprep.mubr.bf16.mxu0 0
        %535 = vmatmul.mubr.bf16.gmra.mrb[0].mxu0 %v365
        %v536 = vpop.f32.mrb[0].mxu0
        %v537 = vadd.f32 0.0, %v536
        %v538 = vpop.f32.mrb[0].mxu0
        %v539 = vpop.f32.mrb[0].mxu0
        %v540 = vadd.f32 0.0, %v539
        %v541 = vpop.f32.mrb[0].mxu0
        %542 = vdwg.mxu0
        %v543 = vadd.f32 %v366, %v481
        %v544 = vadd.f32 %v367, %v484
        %v545 = vadd.f32 %v368, %v489
        %v546 = vadd.f32 %v369, %v492
        %v547 = vadd.f32 %v370, %v497
        %v548 = vadd.f32 %v371, %v500
        %v549 = vadd.f32 %v372, %v505
        %v550 = vadd.f32 %v373, %v508
        %v551 = vadd.f32 %v374, %v513
        %v552 = vadd.f32 %v375, %v516
        %v553 = vadd.f32 %v376, %v521
        %v554 = vadd.f32 %v377, %v524
        %v555 = vadd.f32 %v378, %v529
        %v556 = vadd.f32 %v379, %v532
        %v557 = vadd.f32 %v380, %v537
        %v558 = vadd.f32 %v381, %v540
        %vm559 = vcmask 261120
        %560 = vst.msk [vmem:[#allocation2] sm:$0xff] %vm559, %v543
        %561 = vst.msk [vmem:[#allocation2 + $0x8] sm:$0xff] %vm559, %v544
        %562 = vst.msk [vmem:[#allocation2 + $0x10] sm:$0xff] %vm559, %v545
        %563 = vst.msk [vmem:[#allocation2 + $0x18] sm:$0xff] %vm559, %v546
        %564 = vst.msk [vmem:[#allocation2 + $0x20] sm:$0xff] %vm559, %v547
        %565 = vst.msk [vmem:[#allocation2 + $0x28] sm:$0xff] %vm559, %v548
        %566 = vst.msk [vmem:[#allocation2 + $0x30] sm:$0xff] %vm559, %v549
        %567 = vst.msk [vmem:[#allocation2 + $0x38] sm:$0xff] %vm559, %v550
        %568 = vst.msk [vmem:[#allocation2 + $0x40] sm:$0xff] %vm559, %v551
        %569 = vst.msk [vmem:[#allocation2 + $0x48] sm:$0xff] %vm559, %v552
        %570 = vst.msk [vmem:[#allocation2 + $0x50] sm:$0xff] %vm559, %v553
        %571 = vst.msk [vmem:[#allocation2 + $0x58] sm:$0xff] %vm559, %v554
        %572 = vst.msk [vmem:[#allocation2 + $0x60] sm:$0xff] %vm559, %v555
        %573 = vst.msk [vmem:[#allocation2 + $0x68] sm:$0xff] %vm559, %v556
        %574 = vst.msk [vmem:[#allocation2 + $0x70] sm:$0xff] %vm559, %v557
        %575 = vst.msk [vmem:[#allocation2 + $0x78] sm:$0xff] %vm559, %v558
        %p576 = scmp.eq.s32.totalorder %s24, 1
        // Predicated region
        $region83: #{tpu_custom_call.1} parent=73 // pred_check
          %p577 = pneg %p576
        $region84: #{tpu_custom_call.1} parent=73 // pred_check_branch
          %579 = sbr.rel (%p577) target = $region86
        $region85: #{tpu_custom_call.1} parent=73 // pred_region
          %v580 = vld [vmem:[#allocation2] sm:$0xff]
          %v581 = vld [vmem:[#allocation2 + $0x8] sm:$0xff]
          %v582 = vld [vmem:[#allocation2 + $0x10] sm:$0xff]
          %v583 = vld [vmem:[#allocation2 + $0x18] sm:$0xff]
          %v584 = vld [vmem:[#allocation2 + $0x20] sm:$0xff]
          %v585 = vld [vmem:[#allocation2 + $0x28] sm:$0xff]
          %v586 = vld [vmem:[#allocation2 + $0x30] sm:$0xff]
          %v587 = vld [vmem:[#allocation2 + $0x38] sm:$0xff]
          %v588 = vld [vmem:[#allocation2 + $0x40] sm:$0xff]
          %v589 = vld [vmem:[#allocation2 + $0x48] sm:$0xff]
          %v590 = vld [vmem:[#allocation2 + $0x50] sm:$0xff]
          %v591 = vld [vmem:[#allocation2 + $0x58] sm:$0xff]
          %v592 = vld [vmem:[#allocation2 + $0x60] sm:$0xff]
          %v593 = vld [vmem:[#allocation2 + $0x68] sm:$0xff]
          %v594 = vld [vmem:[#allocation2 + $0x70] sm:$0xff]
          %v595 = vld [vmem:[#allocation2 + $0x78] sm:$0xff]
          %v596 = vld [vmem:[%s329] sm:$0xff]
          %v597 = vld [vmem:[%s329 + $0x8] sm:$0xff]
          %v598 = vld [vmem:[%s329 + $0x10] sm:$0xff]
          %v599 = vld [vmem:[%s329 + $0x18] sm:$0xff]
          %v600 = vld [vmem:[%s329 + $0x20] sm:$0xff]
          %v601 = vld [vmem:[%s329 + $0x28] sm:$0xff]
          %v602 = vld [vmem:[%s329 + $0x30] sm:$0xff]
          %v603 = vld [vmem:[%s329 + $0x38] sm:$0xff]
          %v604 = vld [vmem:[%s329 + $0x40] sm:$0xff]
          %v605 = vld [vmem:[%s329 + $0x48] sm:$0xff]
          %v606 = vld [vmem:[%s329 + $0x50] sm:$0xff]
          %v607 = vld [vmem:[%s329 + $0x58] sm:$0xff]
          %v608 = vld [vmem:[%s329 + $0x60] sm:$0xff]
          %v609 = vld [vmem:[%s329 + $0x68] sm:$0xff]
          %v610 = vld [vmem:[%s329 + $0x70] sm:$0xff]
          %v611 = vld [vmem:[%s329 + $0x78] sm:$0xff]
          %613 = vset.pattern.permute.xlu0 0
          %614 = vperm.xlu0 %613, %v596
          %v615 = vpop.permute.xlu0 %614
          %618 = vset.pattern.permute.xlu0 0
          %619 = vperm.xlu0 %618, %v597
          %v620 = vpop.permute.xlu0 %619
          %623 = vset.pattern.permute.xlu0 0
          %624 = vperm.xlu0 %623, %v598
          %v625 = vpop.permute.xlu0 %624
          %628 = vset.pattern.permute.xlu0 0
          %629 = vperm.xlu0 %628, %v599
          %v630 = vpop.permute.xlu0 %629
          %633 = vset.pattern.permute.xlu0 0
          %634 = vperm.xlu0 %633, %v600
          %v635 = vpop.permute.xlu0 %634
          %638 = vset.pattern.permute.xlu0 0
          %639 = vperm.xlu0 %638, %v601
          %v640 = vpop.permute.xlu0 %639
          %643 = vset.pattern.permute.xlu0 0
          %644 = vperm.xlu0 %643, %v602
          %v645 = vpop.permute.xlu0 %644
          %648 = vset.pattern.permute.xlu0 0
          %649 = vperm.xlu0 %648, %v603
          %v650 = vpop.permute.xlu0 %649
          %653 = vset.pattern.permute.xlu0 0
          %654 = vperm.xlu0 %653, %v604
          %v655 = vpop.permute.xlu0 %654
          %658 = vset.pattern.permute.xlu0 0
          %659 = vperm.xlu0 %658, %v605
          %v660 = vpop.permute.xlu0 %659
          %663 = vset.pattern.permute.xlu0 0
          %664 = vperm.xlu0 %663, %v606
          %v665 = vpop.permute.xlu0 %664
          %668 = vset.pattern.permute.xlu0 0
          %669 = vperm.xlu0 %668, %v607
          %v670 = vpop.permute.xlu0 %669
          %673 = vset.pattern.permute.xlu0 0
          %674 = vperm.xlu0 %673, %v608
          %v675 = vpop.permute.xlu0 %674
          %678 = vset.pattern.permute.xlu0 0
          %679 = vperm.xlu0 %678, %v609
          %v680 = vpop.permute.xlu0 %679
          %683 = vset.pattern.permute.xlu0 0
          %684 = vperm.xlu0 %683, %v610
          %v685 = vpop.permute.xlu0 %684
          %688 = vset.pattern.permute.xlu0 0
          %689 = vperm.xlu0 %688, %v611
          %v690 = vpop.permute.xlu0 %689
          %v692 = vmul.f32 %v580, %v615
          %v693 = vmul.f32 %v581, %v620
          %v694 = vmul.f32 %v582, %v625
          %v695 = vmul.f32 %v583, %v630
          %v696 = vmul.f32 %v584, %v635
          %v697 = vmul.f32 %v585, %v640
          %v698 = vmul.f32 %v586, %v645
          %v699 = vmul.f32 %v587, %v650
          %v700 = vmul.f32 %v588, %v655
          %v701 = vmul.f32 %v589, %v660
          %v702 = vmul.f32 %v590, %v665
          %v703 = vmul.f32 %v591, %v670
          %v704 = vmul.f32 %v592, %v675
          %v705 = vmul.f32 %v593, %v680
          %v706 = vmul.f32 %v594, %v685
          %v707 = vmul.f32 %v595, %v690
          %v708 = vpack.c.bf16 %v693, %v692
          %v709 = vpack.c.bf16 %v695, %v694
          %v710 = vpack.c.bf16 %v697, %v696
          %v711 = vpack.c.bf16 %v699, %v698
          %v712 = vpack.c.bf16 %v701, %v700
          %v713 = vpack.c.bf16 %v703, %v702
          %v714 = vpack.c.bf16 %v705, %v704
          %v715 = vpack.c.bf16 %v707, %v706
          %v716 = vld [vmem:[%s2] sm:$0xf]
          %v717 = vld [vmem:[%s2 + $0x4] sm:$0xf]
          %v718 = vld [vmem:[%s2 + $0x8] sm:$0xf]
          %v719 = vld [vmem:[%s2 + $0xc] sm:$0xf]
          %v720 = vld [vmem:[%s3] sm:$0x1]
          %v722 = vlaneseq
          %v723 = vshrl.u32 %v722, 7
          %v724 = vsub.s32 0, %v723
          %v725 = vrot.slane %v720, %v724
          %v731 = vunpack.c.l.b16 %v716
          %v732 = vunpack.c.l.b16 %v717
          %v733 = vunpack.c.l.b16 %v718
          %v734 = vunpack.c.l.b16 %v719
          %v735 = vpack.c.b16 %v732, %v731
          %v736 = vpack.c.b16 %v734, %v733
          %v740 = vsel %vm559, %v708, 0
          %v743 = vsel %vm559, %v709, 0
          %v746 = vsel %vm559, %v710, 0
          %v749 = vsel %vm559, %v711, 0
          %v752 = vsel %vm559, %v712, 0
          %v755 = vsel %vm559, %v713, 0
          %v758 = vsel %vm559, %v714, 0
          %v761 = vsel %vm559, %v715, 0
          %763 = vmatprep.subr.bf16.mxu0 0
          %764 = vmatpush1.bf16.msra.mxu0 %v735
          %765 = vmatprep.subr.bf16.mxu0 0
          %766 = vmatpush1.bf16.msra.mxu0 %v736
          %767 = vmatprep.subr.bf16.mxu0 0
          %768 = vmatpush1.bf16.msra.mxu0 0
          %769 = vmatprep.subr.bf16.mxu0 0
          %770 = vmatpush1.bf16.msra.mxu0 0
          %771 = vmatprep.subr.bf16.mxu0 0
          %772 = vmatpush1.bf16.msra.mxu0 0
          %773 = vmatprep.subr.bf16.mxu0 0
          %774 = vmatpush1.bf16.msra.mxu0 0
          %775 = vmatprep.subr.bf16.mxu0 0
          %776 = vmatpush1.bf16.msra.mxu0 0
          %777 = vmatprep.subr.bf16.mxu0 0
          %778 = vmatpush1.bf16.msra.mxu0 0
          %779 = vmatprep.subr.bf16.mxu0 0
          %780 = vmatpush1.bf16.msra.mxu0 0
          %781 = vmatprep.subr.bf16.mxu0 0
          %782 = vmatpush1.bf16.msra.mxu0 0
          %783 = vmatprep.subr.bf16.mxu0 0
          %784 = vmatpush1.bf16.msra.mxu0 0
          %785 = vmatprep.subr.bf16.mxu0 0
          %786 = vmatpush1.bf16.msra.mxu0 0
          %787 = vmatprep.subr.bf16.mxu0 0
          %788 = vmatpush1.bf16.msra.mxu0 0
          %789 = vmatprep.subr.bf16.mxu0 0
          %790 = vmatpush1.bf16.msra.mxu0 0
          %791 = vmatprep.subr.bf16.mxu0 0
          %792 = vmatpush1.bf16.msra.mxu0 0
          %793 = vmatprep.subr.bf16.mxu0 0
          %794 = vmatpush1.bf16.msra.mxu0 0
          %795 = vmatprep.mubr.bf16.mxu0 0
          %796 = vmatmul.mubr.bf16.gmra.mrb[0].mxu0 %v740
          %v797 = vpop.f32.mrb[0].mxu0
          %v798 = vadd.f32 %v725, %v797
          %v799 = vpop.f32.mrb[0].mxu0
          %v800 = vpop.f32.mrb[0].mxu0
          %v801 = vadd.f32 %v725, %v800
          %v802 = vpop.f32.mrb[0].mxu0
          %803 = vmatprep.mubr.bf16.mxu0 0
          %804 = vmatmul.mubr.bf16.gmra.mrb[0].mxu0 %v743
          %v805 = vpop.f32.mrb[0].mxu0
          %v806 = vadd.f32 %v725, %v805
          %v807 = vpop.f32.mrb[0].mxu0
          %v808 = vpop.f32.mrb[0].mxu0
          %v809 = vadd.f32 %v725, %v808
          %v810 = vpop.f32.mrb[0].mxu0
          %811 = vmatprep.mubr.bf16.mxu0 0
          %812 = vmatmul.mubr.bf16.gmra.mrb[0].mxu0 %v746
          %v813 = vpop.f32.mrb[0].mxu0
          %v814 = vadd.f32 %v725, %v813
          %v815 = vpop.f32.mrb[0].mxu0
          %v816 = vpop.f32.mrb[0].mxu0
          %v817 = vadd.f32 %v725, %v816
          %v818 = vpop.f32.mrb[0].mxu0
          %819 = vmatprep.mubr.bf16.mxu0 0
          %820 = vmatmul.mubr.bf16.gmra.mrb[0].mxu0 %v749
          %v821 = vpop.f32.mrb[0].mxu0
          %v822 = vadd.f32 %v725, %v821
          %v823 = vpop.f32.mrb[0].mxu0
          %v824 = vpop.f32.mrb[0].mxu0
          %v825 = vadd.f32 %v725, %v824
          %v826 = vpop.f32.mrb[0].mxu0
          %827 = vmatprep.mubr.bf16.mxu0 0
          %828 = vmatmul.mubr.bf16.gmra.mrb[0].mxu0 %v752
          %v829 = vpop.f32.mrb[0].mxu0
          %v830 = vadd.f32 %v725, %v829
          %v831 = vpop.f32.mrb[0].mxu0
          %v832 = vpop.f32.mrb[0].mxu0
          %v833 = vadd.f32 %v725, %v832
          %v834 = vpop.f32.mrb[0].mxu0
          %835 = vmatprep.mubr.bf16.mxu0 0
          %836 = vmatmul.mubr.bf16.gmra.mrb[0].mxu0 %v755
          %v837 = vpop.f32.mrb[0].mxu0
          %v838 = vadd.f32 %v725, %v837
          %v839 = vpop.f32.mrb[0].mxu0
          %v840 = vpop.f32.mrb[0].mxu0
          %v841 = vadd.f32 %v725, %v840
          %v842 = vpop.f32.mrb[0].mxu0
          %843 = vmatprep.mubr.bf16.mxu0 0
          %844 = vmatmul.mubr.bf16.gmra.mrb[0].mxu0 %v758
          %v845 = vpop.f32.mrb[0].mxu0
          %v846 = vadd.f32 %v725, %v845
          %v847 = vpop.f32.mrb[0].mxu0
          %v848 = vpop.f32.mrb[0].mxu0
          %v849 = vadd.f32 %v725, %v848
          %v850 = vpop.f32.mrb[0].mxu0
          %851 = vmatprep.mubr.bf16.mxu0 0
          %852 = vmatmul.mubr.bf16.gmra.mrb[0].mxu0 %v761
          %v853 = vpop.f32.mrb[0].mxu0
          %v854 = vadd.f32 %v725, %v853
          %v855 = vpop.f32.mrb[0].mxu0
          %v856 = vpop.f32.mrb[0].mxu0
          %v857 = vadd.f32 %v725, %v856
          %v858 = vpop.f32.mrb[0].mxu0
          %859 = vdwg.mxu0
          %v860 = vmax.f32 %v798, 0.0
          %v861 = vmax.f32 %v801, 0.0
          %v862 = vmax.f32 %v806, 0.0
          %v863 = vmax.f32 %v809, 0.0
          %v864 = vmax.f32 %v814, 0.0
          %v865 = vmax.f32 %v817, 0.0
          %v866 = vmax.f32 %v822, 0.0
          %v867 = vmax.f32 %v825, 0.0
          %v868 = vmax.f32 %v830, 0.0
          %v869 = vmax.f32 %v833, 0.0
          %v870 = vmax.f32 %v838, 0.0
          %v871 = vmax.f32 %v841, 0.0
          %v872 = vmax.f32 %v846, 0.0
          %v873 = vmax.f32 %v849, 0.0
          %v874 = vmax.f32 %v854, 0.0
          %v875 = vmax.f32 %v857, 0.0
          %v876 = vpack.c.bf16 %v861, %v860
          %v877 = vpack.c.bf16 %v863, %v862
          %v878 = vpack.c.bf16 %v865, %v864
          %v879 = vpack.c.bf16 %v867, %v866
          %v880 = vpack.c.bf16 %v869, %v868
          %v881 = vpack.c.bf16 %v871, %v870
          %v882 = vpack.c.bf16 %v873, %v872
          %v883 = vpack.c.bf16 %v875, %v874
          %v892 = vunpack.c.l.b16 %v876
          %v893 = vunpack.c.h.b16 %v876
          %v894 = vunpack.c.l.b16 %v877
          %v895 = vunpack.c.h.b16 %v877
          %v896 = vunpack.c.l.b16 %v878
          %v897 = vunpack.c.h.b16 %v878
          %v898 = vunpack.c.l.b16 %v879
          %v899 = vunpack.c.h.b16 %v879
          %v900 = vunpack.c.l.b16 %v880
          %v901 = vunpack.c.h.b16 %v880
          %v902 = vunpack.c.l.b16 %v881
          %v903 = vunpack.c.h.b16 %v881
          %v904 = vunpack.c.l.b16 %v882
          %v905 = vunpack.c.h.b16 %v882
          %v906 = vunpack.c.l.b16 %v883
          %v907 = vunpack.c.h.b16 %v883
          %v908 = vpack.c.b16 %v892, %v892
          %v909 = vpack.c.b16 %v893, %v893
          %v910 = vpack.c.b16 %v894, %v894
          %v911 = vpack.c.b16 %v895, %v895
          %v912 = vpack.c.b16 %v896, %v896
          %v913 = vpack.c.b16 %v897, %v897
          %v914 = vpack.c.b16 %v898, %v898
          %v915 = vpack.c.b16 %v899, %v899
          %v916 = vpack.c.b16 %v900, %v900
          %v917 = vpack.c.b16 %v901, %v901
          %v918 = vpack.c.b16 %v902, %v902
          %v919 = vpack.c.b16 %v903, %v903
          %v920 = vpack.c.b16 %v904, %v904
          %v921 = vpack.c.b16 %v905, %v905
          %v922 = vpack.c.b16 %v906, %v906
          %v923 = vpack.c.b16 %v907, %v907
          %940 = vst [vmem:[%s317] sm:$0xf] %v908
          %941 = vst [vmem:[%s317 + $0x4] sm:$0xf] %v909
          %942 = vst [vmem:[%s317 + $0x8] sm:$0xf] %v910
          %943 = vst [vmem:[%s317 + $0xc] sm:$0xf] %v911
          %944 = vst [vmem:[%s317 + $0x10] sm:$0xf] %v912
          %945 = vst [vmem:[%s317 + $0x14] sm:$0xf] %v913
          %946 = vst [vmem:[%s317 + $0x18] sm:$0xf] %v914
          %947 = vst [vmem:[%s317 + $0x1c] sm:$0xf] %v915
          %948 = vst [vmem:[%s317 + $0x20] sm:$0xf] %v916
          %949 = vst [vmem:[%s317 + $0x24] sm:$0xf] %v917
          %950 = vst [vmem:[%s317 + $0x28] sm:$0xf] %v918
          %951 = vst [vmem:[%s317 + $0x2c] sm:$0xf] %v919
          %952 = vst [vmem:[%s317 + $0x30] sm:$0xf] %v920
          %953 = vst [vmem:[%s317 + $0x34] sm:$0xf] %v921
          %954 = vst [vmem:[%s317 + $0x38] sm:$0xf] %v922
          %955 = vst [vmem:[%s317 + $0x3c] sm:$0xf] %v923
        $region86: #{tpu_custom_call.1} parent=73 // pred_fallthru
          _
        %s956 = sand.u32 %s161, 1
        %s957 = scalar_lea.sflag [#allocation5], %s956
        %s958 = sand.u32 %s161, 1
        %s959 = smul.addr %s958, 64
        %s960 = scalar_lea.vmem [#allocation4], %s959
        // Predicated region
        $region87: #{tpu_custom_call.1} parent=73 // pred_check
          %p961 = pneg %p171
        $region88: #{tpu_custom_call.1} parent=73 // pred_check_branch
          %963 = sbr.rel (%p961) target = $region90
        $region89: #{tpu_custom_call.1} parent=73 // pred_region
          %s964 = smul.u32 16, %s23
          %s966 = ssub.s32 1024, 1024
          %967 = vsyncadd %s957, %s966
          %s968 = smul.addr %s964, 64
          %s969 = scalar_lea.hbm %s5, %s968
          %s970 = sshll.u32 %s960, 4
          %s971 = int_to_ptr.vmem [resolvable:$true] %s970
          %976 = dma.vmem_to_hbm [thread:$0]  %s971, 1024, %s969, %s957, 64, 64, 4
        $region90: #{tpu_custom_call.1} parent=73 // pred_fallthru
          _
      $region74: #{tpu_custom_call.1} parent=5 // pred_fallthru
        _
      %p977 = scmp.le.s32.totalorder 2, %s14
      // Predicated region
      $region91: #{tpu_custom_call.1} parent=5 // pred_check
        %p978 = pneg %p977
      $region92: #{tpu_custom_call.1} parent=5 // pred_check_branch
        %980 = sbr.rel (%p978) target = $region94
      $region93: #{tpu_custom_call.1} parent=5 // pred_region
        %s981 = ssub.s32 %s14, 2
        // Predicated region
        $region95: #{tpu_custom_call.1} parent=93 // pred_check
          %p982 = pneg %p177
        $region96: #{tpu_custom_call.1} parent=93 // pred_check_branch
          %984 = sbr.rel (%p982) target = $region98
        $region97: #{tpu_custom_call.1} parent=93 // pred_region
          %s985 = sand.u32 %s162, 1
          %s986 = scalar_lea.sflag [#allocation5], %s985
          %s987 = sand.u32 %s162, 1
          %s988 = smul.addr %s987, 64
          %s989 = scalar_lea.vmem [#allocation4], %s988
          %990 = dma.done %s986, 1024
        $region98: #{tpu_custom_call.1} parent=93 // pred_fallthru
          _
      $region94: #{tpu_custom_call.1} parent=5 // pred_fallthru
        _
    $region6: #{tpu_custom_call.1} parent=1 // loop_footer
      %s18 = sadd.s32 1, %s14
    $region7: #{tpu_custom_call.1} parent=1 // loop_footer_branch
      %13 = sbr.rel target = $region3
    $region8: #{tpu_custom_call.1} parent=1 // loop_exit
      _
    %991 = vsyncpa [#allocation5], 1
    %s992 = scalar_lea.sflag [#allocation5], 1
    %993 = vsyncpa %s992, 1

</llo_original>
